<compile_context>
chip_gen: v6e
topology: v6e:2x2x1
jax: 0.10.0
libtpu: 0.0.40
codegen_flags: <defaults>
</compile_context>

<pallas_src>
import functools

import jax
import jax.numpy as jnp
from jax.experimental import pallas as pl
from jax.experimental.pallas import tpu as pltpu


def fraud_mlp_kernel(x_ref, w1_ref, b1_ref, w2_ref, b2_ref, w3_ref, b3_ref, o_ref):
    x = x_ref[...]

    # Linear(D, 16) + ReLU   (lane-packed: (P*D, P*16) block-diagonal weights)
    h1 = jnp.dot(x, w1_ref[...], preferred_element_type=jnp.float32) + b1_ref[...]
    h1 = jnp.maximum(h1, 0.0)

    # Linear(16, 8) + ReLU
    h2 = jnp.dot(h1, w2_ref[...], preferred_element_type=jnp.float32) + b2_ref[...]
    h2 = jnp.maximum(h2, 0.0)

    # Linear(8, 1) + Sigmoid;  sigmoid(z) == 0.5*(tanh(z/2)+1)  -> single EUP op
    z = jnp.dot(h2, w3_ref[...], preferred_element_type=jnp.float32) + b3_ref[...]
    o_ref[...] = (0.5 * (jnp.tanh(0.5 * z) + 1.0)).astype(o_ref.dtype)


# ---------------------------------------------------------------------------------
# Tiling configuration
# ---------------------------------------------------------------------------------
_VMEM_BUDGET_BYTES = 24 * 1024 * 1024   # pipeline buffers + live intermediates
_VMEM_LIMIT_BYTES = 32 * 1024 * 1024    # safe scoped limit on v5e/v6e/v7x
_MAX_SAMPLES_PER_TILE = 32768           # cap on samples per grid step


def _round_up(x, m):
    return ((x + m - 1) // m) * m


def _round_down(x, m):
    return (x // m) * m


def _lane_pad_bytes(n_lanes):
    """f32 VMEM bytes per row for an array with n_lanes in the last dim (128-lane tiles)."""
    return _round_up(max(n_lanes, 1), 128) * 4


# ---------------------------------------------------------------------------------
# One-time parameter preparation (outside the per-call hot path)
# ---------------------------------------------------------------------------------
def prepare_params(params, input_size):
    """Precompute lane-packed (block-diagonal) weights once.

    When D divides 128, P = 128 // D samples are packed per VMEM row; the weights are
    replicated block-diagonally (kron(I_P, W)) and the biases tiled so every
    activation is P x more lane-dense.  Both the packed and the original (P=1)
    parameter sets are returned so the forward pass can pick either at trace time
    without re-doing the kron per call.
    """
    D = input_size
    P = (128 // D) if (D < 128 and 128 % D == 0) else 1

    base = {k: v.astype(jnp.float32) for k, v in params.items()}
    if P == 1:
        # TODO(synk): for D not dividing 128, feature-dim padding could restore lane
        # packing, but it would reintroduce a full copy of x; left unpacked instead.
        return {"P": 1, "packed": base, "base": base}

    def pack_w(w):
        return jnp.kron(jnp.eye(P, dtype=w.dtype), w)

    def pack_b(b):
        return jnp.tile(b, (1, P))

    packed = {
        "w1": pack_w(base["w1"]), "b1": pack_b(base["b1"]),
        "w2": pack_w(base["w2"]), "b2": pack_b(base["b2"]),
        "w3": pack_w(base["w3"]), "b3": pack_b(base["b3"]),
    }
    return {"P": P, "packed": packed, "base": base}


# ---------------------------------------------------------------------------------
# Forward pass
# ---------------------------------------------------------------------------------
@functools.partial(jax.jit, static_argnames=("pack",))
def _fraud_forward_impl(x, p, *, pack):
    B, D = x.shape
    P = pack
    f32 = jnp.float32
    x = x.astype(f32)

    rows = B // P
    lanes = P * D
    if P > 1:
        # Free row-major re-view: fold P consecutive samples into the lane dim.
        x = x.reshape(rows, lanes)

    # --- per-step row block sized from a VMEM budget --------------------------------
    x_row = _lane_pad_bytes(lanes)   # x pipeline buffer bytes per row
    o_row = _lane_pad_bytes(P)       # out pipeline buffer bytes per row (lane-padded)
    h_row = _lane_pad_bytes(64)      # widest intermediate (<=128 lanes once padded)
    # double-buffered x/out pipeline buffers + live kernel temporaries (x, h1/h2)
    per_row = 2 * (x_row + o_row) + (x_row + 2 * h_row)
    row_tile = max(8, _round_down(_VMEM_BUDGET_BYTES // per_row, 8))
    row_tile = min(row_tile, max(8, _round_down(_MAX_SAMPLES_PER_TILE // P, 8)))

    if rows <= 16:
        row_block = rows                                     # tiny batch: one full-extent block
    else:
        # >=2 grid steps so v7x's two TensorCores can split the ("parallel",) batch axis.
        row_block = min(row_tile, _round_up(pl.cdiv(rows, 2), 8))
    grid = (pl.cdiv(rows, row_block),)
    # Note: no padding of x anywhere.  If row_block does not divide rows, Pallas
    # handles the partial last block (OOB reads stay in their own rows and the
    # corresponding OOB stores are dropped), so garbage never reaches valid outputs.

    def const_spec(shape):
        # Full-array block, constant index map -> fetched once, VMEM-resident.
        return pl.BlockSpec(shape, lambda i: (0, 0))

    out = pl.pallas_call(
        fraud_mlp_kernel,
        out_shape=jax.ShapeDtypeStruct((rows, P), f32),
        grid=grid,
        in_specs=[
            pl.BlockSpec((row_block, lanes), lambda i: (i, 0)),   # x: streamed tiles
            const_spec(p["w1"].shape), const_spec(p["b1"].shape),
            const_spec(p["w2"].shape), const_spec(p["b2"].shape),
            const_spec(p["w3"].shape), const_spec(p["b3"].shape),
        ],
        out_specs=pl.BlockSpec((row_block, P), lambda i: (i, 0)),
        compiler_params=pltpu.CompilerParams(
            dimension_semantics=("parallel",),     # shard batch grid across TCs (v7x)
            vmem_limit_bytes=_VMEM_LIMIT_BYTES,    # safe on v5e/v6e/v7x
        ),
    )(x, p["w1"], p["b1"], p["w2"], p["b2"], p["w3"], p["b3"])

    # Un-pack lanes back to (B, 1) (free reshape; no padding to strip).
    return out.reshape(B, 1) if P > 1 else out


def fraud_meta_model_forward(x, prepared):
    """x: (B, D) float.  prepared: output of prepare_params()."""
    B, _ = x.shape
    P = prepared["P"]
    if P > 1 and B % P == 0:
        return _fraud_forward_impl(x, prepared["packed"], pack=P)
    # Ragged batch: unpacked (P=1) path -> zero extra copies of x, no jnp.pad.
    return _fraud_forward_impl(x, prepared["base"], pack=1)


# ---------------------------------------------------------------------------------
# Init / reference
# ---------------------------------------------------------------------------------
def init_params(key, input_size):
    """Deterministic synthetic init (PyTorch-Linear-like uniform fan-in scaling).

    Weights are stored as (in, out) so the kernel computes x @ W + b, which equals
    PyTorch's x @ W.T + b.
    """
    ks = jax.random.split(key, 6)

    def lin(kw, kb, fan_in, fan_out):
        bound = 1.0 / jnp.sqrt(fan_in)
        w = jax.random.uniform(kw, (fan_in, fan_out), jnp.float32, -bound, bound)
        b = jax.random.uniform(kb, (1, fan_out), jnp.float32, -bound, bound)
        return w, b

    w1, b1 = lin(ks[0], ks[1], input_size, 16)
    w2, b2 = lin(ks[2], ks[3], 16, 8)
    w3, b3 = lin(ks[4], ks[5], 8, 1)
    return {"w1": w1, "b1": b1, "w2": w2, "b2": b2, "w3": w3, "b3": b3}


def reference_forward(x, p):
    h1 = jnp.maximum(x @ p["w1"] + p["b1"], 0.0)
    h2 = jnp.maximum(h1 @ p["w2"] + p["b2"], 0.0)
    return jax.nn.sigmoid(h2 @ p["w3"] + p["b3"])


if __name__ == "__main__":
    key = jax.random.PRNGKey(0)
    k_x, k_p, k_x2 = jax.random.split(key, 3)

    input_size = 32
    params = init_params(k_p, input_size)
    prepared = prepare_params(params, input_size)   # one-time weight packing

    # Small aligned batch -> lane-packed path (P=4), single full-extent block.
    x = jax.random.normal(k_x, (8, input_size), dtype=jnp.float32)
    out = jax.block_until_ready(fraud_meta_model_forward(x, prepared))
    ref = reference_forward(x, params)
    assert out.shape == (8, 1)
    assert jnp.allclose(out, ref, atol=2e-5, rtol=2e-5)

    # Ragged batch -> unpacked fallback, multi-step grid with a partial last block
    # (exercises the no-pad path end to end).
    x2 = jax.random.normal(k_x2, (103, input_size), dtype=jnp.float32)
    out2 = jax.block_until_ready(fraud_meta_model_forward(x2, prepared))
    ref2 = reference_forward(x2, params)
    assert out2.shape == (103, 1)
    assert jnp.allclose(out2, ref2, atol=2e-5, rtol=2e-5)

    print("KERNEL_OK")
</pallas_src>

<mosaic_0001>
module attributes {stable_mosaic.version = 11 : i64} {
  func.func @fraud_mlp_kernel(%arg0: i32, %arg1: memref<2x128xf32, #tpu.memory_space<vmem>>, %arg2: memref<128x64xf32, #tpu.memory_space<vmem>>, %arg3: memref<1x64xf32, #tpu.memory_space<vmem>>, %arg4: memref<64x32xf32, #tpu.memory_space<vmem>>, %arg5: memref<1x32xf32, #tpu.memory_space<vmem>>, %arg6: memref<32x4xf32, #tpu.memory_space<vmem>>, %arg7: memref<1x4xf32, #tpu.memory_space<vmem>>, %arg8: memref<2x4xf32, #tpu.memory_space<vmem>>) attributes {dimension_semantics = [#tpu.dimension_semantics<parallel>], iteration_bounds = array<i64: 1>, scalar_prefetch = 0 : i64, scratch_operands = 0 : i64, tpu.core_type = #tpu.core_type<tc>, window_params = [{transform_indices = @transform_0, window_bounds = array<i64: 2, 128>}, {pipeline_mode = #tpu.pipeline_mode<synchronous>, transform_indices = @transform_1, window_bounds = array<i64: 128, 64>}, {pipeline_mode = #tpu.pipeline_mode<synchronous>, transform_indices = @transform_2, window_bounds = array<i64: 1, 64>}, {pipeline_mode = #tpu.pipeline_mode<synchronous>, transform_indices = @transform_3, window_bounds = array<i64: 64, 32>}, {pipeline_mode = #tpu.pipeline_mode<synchronous>, transform_indices = @transform_4, window_bounds = array<i64: 1, 32>}, {pipeline_mode = #tpu.pipeline_mode<synchronous>, transform_indices = @transform_5, window_bounds = array<i64: 32, 4>}, {pipeline_mode = #tpu.pipeline_mode<synchronous>, transform_indices = @transform_6, window_bounds = array<i64: 1, 4>}, {transform_indices = @transform_7, window_bounds = array<i64: 2, 4>}]} {
    %c0 = arith.constant 0 : index
    %c0_0 = arith.constant 0 : index
    %0 = vector.load %arg1[%c0, %c0_0] : memref<2x128xf32, #tpu.memory_space<vmem>>, vector<2x128xf32>
    %c0_1 = arith.constant 0 : index
    %c0_2 = arith.constant 0 : index
    %1 = vector.load %arg2[%c0_1, %c0_2] : memref<128x64xf32, #tpu.memory_space<vmem>>, vector<128x64xf32>
    %cst = arith.constant dense<0.000000e+00> : vector<2x64xf32>
    %2 = tpu.matmul %0, %1, %cst {dimension_numbers = #tpu.dot_dimension_numbers<[1], [0], [0], [1], [0, 0, 1, 1], [], []>} : vector<2x128xf32>, vector<128x64xf32>, vector<2x64xf32> -> vector<2x64xf32>
    %c0_3 = arith.constant 0 : index
    %c0_4 = arith.constant 0 : index
    %3 = vector.load %arg3[%c0_3, %c0_4] : memref<1x64xf32, #tpu.memory_space<vmem>>, vector<1x64xf32>
    %4 = vector.broadcast %3 : vector<1x64xf32> to vector<2x64xf32>
    %5 = arith.addf %2, %4 : vector<2x64xf32>
    %cst_5 = arith.constant 0.000000e+00 : f32
    %6 = vector.broadcast %cst_5 : f32 to vector<2x64xf32>
    %7 = arith.maximumf %5, %6 : vector<2x64xf32>
    %c0_6 = arith.constant 0 : index
    %c0_7 = arith.constant 0 : index
    %8 = vector.load %arg4[%c0_6, %c0_7] : memref<64x32xf32, #tpu.memory_space<vmem>>, vector<64x32xf32>
    %cst_8 = arith.constant dense<0.000000e+00> : vector<2x32xf32>
    %9 = tpu.matmul %7, %8, %cst_8 {dimension_numbers = #tpu.dot_dimension_numbers<[1], [0], [0], [1], [0, 0, 1, 1], [], []>} : vector<2x64xf32>, vector<64x32xf32>, vector<2x32xf32> -> vector<2x32xf32>
    %c0_9 = arith.constant 0 : index
    %c0_10 = arith.constant 0 : index
    %10 = vector.load %arg5[%c0_9, %c0_10] : memref<1x32xf32, #tpu.memory_space<vmem>>, vector<1x32xf32>
    %11 = vector.broadcast %10 : vector<1x32xf32> to vector<2x32xf32>
    %12 = arith.addf %9, %11 : vector<2x32xf32>
    %cst_11 = arith.constant 0.000000e+00 : f32
    %13 = vector.broadcast %cst_11 : f32 to vector<2x32xf32>
    %14 = arith.maximumf %12, %13 : vector<2x32xf32>
    %c0_12 = arith.constant 0 : index
    %c0_13 = arith.constant 0 : index
    %15 = vector.load %arg6[%c0_12, %c0_13] : memref<32x4xf32, #tpu.memory_space<vmem>>, vector<32x4xf32>
    %cst_14 = arith.constant dense<0.000000e+00> : vector<2x4xf32>
    %16 = tpu.matmul %14, %15, %cst_14 {dimension_numbers = #tpu.dot_dimension_numbers<[1], [0], [0], [1], [0, 0, 1, 1], [], []>} : vector<2x32xf32>, vector<32x4xf32>, vector<2x4xf32> -> vector<2x4xf32>
    %c0_15 = arith.constant 0 : index
    %c0_16 = arith.constant 0 : index
    %17 = vector.load %arg7[%c0_15, %c0_16] : memref<1x4xf32, #tpu.memory_space<vmem>>, vector<1x4xf32>
    %18 = vector.broadcast %17 : vector<1x4xf32> to vector<2x4xf32>
    %19 = arith.addf %16, %18 : vector<2x4xf32>
    %cst_17 = arith.constant 5.000000e-01 : f32
    %20 = vector.broadcast %cst_17 : f32 to vector<2x4xf32>
    %21 = arith.mulf %20, %19 : vector<2x4xf32>
    %22 = math.tanh %21 : vector<2x4xf32>
    %cst_18 = arith.constant 1.000000e+00 : f32
    %23 = vector.broadcast %cst_18 : f32 to vector<2x4xf32>
    %24 = arith.addf %22, %23 : vector<2x4xf32>
    %cst_19 = arith.constant 5.000000e-01 : f32
    %25 = vector.broadcast %cst_19 : f32 to vector<2x4xf32>
    %26 = arith.mulf %25, %24 : vector<2x4xf32>
    %c0_20 = arith.constant 0 : index
    %c0_21 = arith.constant 0 : index
    %27 = vector.load %arg8[%c0_20, %c0_21] : memref<2x4xf32, #tpu.memory_space<vmem>>, vector<2x4xf32>
    tpu.vector_store %arg8[%c0_20, %c0_21], %26 {strides = array<i32>} : memref<2x4xf32, #tpu.memory_space<vmem>>, vector<2x4xf32>,
    return
  }
  func.func @transform_0(%arg0: i32) -> (i32, i32) {
    %c0_i32 = arith.constant 0 : i32
    %c0_i32_0 = arith.constant 0 : i32
    return %arg0, %c0_i32 : i32, i32
  }
  func.func @transform_1(%arg0: i32) -> (i32, i32) {
    %c0_i32 = arith.constant 0 : i32
    %c0_i32_0 = arith.constant 0 : i32
    %c0_i32_1 = arith.constant 0 : i32
    return %c0_i32, %c0_i32_0 : i32, i32
  }
  func.func @transform_2(%arg0: i32) -> (i32, i32) {
    %c0_i32 = arith.constant 0 : i32
    %c0_i32_0 = arith.constant 0 : i32
    %c0_i32_1 = arith.constant 0 : i32
    return %c0_i32, %c0_i32_0 : i32, i32
  }
  func.func @transform_3(%arg0: i32) -> (i32, i32) {
    %c0_i32 = arith.constant 0 : i32
    %c0_i32_0 = arith.constant 0 : i32
    %c0_i32_1 = arith.constant 0 : i32
    return %c0_i32, %c0_i32_0 : i32, i32
  }
  func.func @transform_4(%arg0: i32) -> (i32, i32) {
    %c0_i32 = arith.constant 0 : i32
    %c0_i32_0 = arith.constant 0 : i32
    %c0_i32_1 = arith.constant 0 : i32
    return %c0_i32, %c0_i32_0 : i32, i32
  }
  func.func @transform_5(%arg0: i32) -> (i32, i32) {
    %c0_i32 = arith.constant 0 : i32
    %c0_i32_0 = arith.constant 0 : i32
    %c0_i32_1 = arith.constant 0 : i32
    return %c0_i32, %c0_i32_0 : i32, i32
  }
  func.func @transform_6(%arg0: i32) -> (i32, i32) {
    %c0_i32 = arith.constant 0 : i32
    %c0_i32_0 = arith.constant 0 : i32
    %c0_i32_1 = arith.constant 0 : i32
    return %c0_i32, %c0_i32_0 : i32, i32
  }
  func.func @transform_7(%arg0: i32) -> (i32, i32) {
    %c0_i32 = arith.constant 0 : i32
    %c0_i32_0 = arith.constant 0 : i32
    return %arg0, %c0_i32 : i32, i32
  }
}

</mosaic_0001>

<llo_original>
// kernel: _fraud_forward_impl.1
$region0: #{_fraud_forward_impl.1}
  #allocation0 [shape = 'u32[]', space=smem, size = 0x4, offset = 0x4, fixed_abs, tag = 'smem constant byte address 0x4 - core index']
  #allocation1 [shape = 'u32[144,128]{1,0:T(1,128)}', space=vmem, size = 0x12000, scoped, tag = 'internal scratch']
  %s0 = inlined_call_operand.vmem [shape: f32[2,128], index: 0, kind: input, shape index: {}]
  %s1 = inlined_call_operand.vmem [shape: f32[128,64], index: 1, kind: input, shape index: {}]
  %s2 = inlined_call_operand.vmem [shape: f32[1,64], index: 2, kind: input, shape index: {}]
  %s3 = inlined_call_operand.vmem [shape: f32[64,32], index: 3, kind: input, shape index: {}]
  %s4 = inlined_call_operand.vmem [shape: f32[1,32], index: 4, kind: input, shape index: {}]
  %s5 = inlined_call_operand.vmem [shape: f32[32,4], index: 5, kind: input, shape index: {}]
  %s6 = inlined_call_operand.vmem [shape: f32[1,4], index: 6, kind: input, shape index: {}]
  %s7 = inlined_call_operand.vmem [shape: f32[2,4], index: 7, kind: output, shape index: {}]
  %s8 = sld [smem:[#allocation0]]
  $region38: #{_fraud_forward_impl.1} parent=0
    _
  %s10 = ssub.s32 1, %s8
  %s11 = scalar_select 0, %s10, %s8
  // Predicated region
  $region2: #{_fraud_forward_impl.1} parent=0 // pred_check
    _
  $region3: #{_fraud_forward_impl.1} parent=0 // pred_check_branch
    %13 = sbr.rel (0) target = $region5
  $region4: #{_fraud_forward_impl.1} parent=0 // pred_region
    _
  $region5: #{_fraud_forward_impl.1} parent=0 // pred_fallthru
    _
  // Predicated region
  $region6: #{_fraud_forward_impl.1} parent=0 // pred_check
    _
  $region7: #{_fraud_forward_impl.1} parent=0 // pred_check_branch
    %15 = sbr.rel (0) target = $region9
  $region8: #{_fraud_forward_impl.1} parent=0 // pred_region
    _
  $region9: #{_fraud_forward_impl.1} parent=0 // pred_fallthru
    _
  // Predicated region
  $region10: #{_fraud_forward_impl.1} parent=0 // pred_check
    _
  $region11: #{_fraud_forward_impl.1} parent=0 // pred_check_branch
    %17 = sbr.rel (0) target = $region13
  $region12: #{_fraud_forward_impl.1} parent=0 // pred_region
    _
  $region13: #{_fraud_forward_impl.1} parent=0 // pred_fallthru
    _
  // Predicated region
  $region14: #{_fraud_forward_impl.1} parent=0 // pred_check
    _
  $region15: #{_fraud_forward_impl.1} parent=0 // pred_check_branch
    %19 = sbr.rel (0) target = $region17
  $region16: #{_fraud_forward_impl.1} parent=0 // pred_region
    _
  $region17: #{_fraud_forward_impl.1} parent=0 // pred_fallthru
    _
  // Predicated region
  $region18: #{_fraud_forward_impl.1} parent=0 // pred_check
    _
  $region19: #{_fraud_forward_impl.1} parent=0 // pred_check_branch
    %21 = sbr.rel (0) target = $region21
  $region20: #{_fraud_forward_impl.1} parent=0 // pred_region
    _
  $region21: #{_fraud_forward_impl.1} parent=0 // pred_fallthru
    _
  // Predicated region
  $region22: #{_fraud_forward_impl.1} parent=0 // pred_check
    _
  $region23: #{_fraud_forward_impl.1} parent=0 // pred_check_branch
    %23 = sbr.rel (0) target = $region25
  $region24: #{_fraud_forward_impl.1} parent=0 // pred_region
    _
  $region25: #{_fraud_forward_impl.1} parent=0 // pred_fallthru
    _
  // Predicated region
  $region26: #{_fraud_forward_impl.1} parent=0 // pred_check
    _
  $region27: #{_fraud_forward_impl.1} parent=0 // pred_check_branch
    %25 = sbr.rel (0) target = $region29
  $region28: #{_fraud_forward_impl.1} parent=0 // pred_region
    _
  $region29: #{_fraud_forward_impl.1} parent=0 // pred_fallthru
    _
  %v26 = vld [vmem:[%s0] sm:$0x3]
  %v27 = vld [vmem:[%s1] sm:$0xff]
  %v28 = vld [vmem:[%s1 + $0x8] sm:$0xff]
  %v29 = vld [vmem:[%s1 + $0x10] sm:$0xff]
  %v30 = vld [vmem:[%s1 + $0x18] sm:$0xff]
  %v31 = vld [vmem:[%s1 + $0x20] sm:$0xff]
  %v32 = vld [vmem:[%s1 + $0x28] sm:$0xff]
  %v33 = vld [vmem:[%s1 + $0x30] sm:$0xff]
  %v34 = vld [vmem:[%s1 + $0x38] sm:$0xff]
  %v35 = vld [vmem:[%s1 + $0x40] sm:$0xff]
  %v36 = vld [vmem:[%s1 + $0x48] sm:$0xff]
  %v37 = vld [vmem:[%s1 + $0x50] sm:$0xff]
  %v38 = vld [vmem:[%s1 + $0x58] sm:$0xff]
  %v39 = vld [vmem:[%s1 + $0x60] sm:$0xff]
  %v40 = vld [vmem:[%s1 + $0x68] sm:$0xff]
  %v41 = vld [vmem:[%s1 + $0x70] sm:$0xff]
  %v42 = vld [vmem:[%s1 + $0x78] sm:$0xff]
  %v43 = vld [vmem:[%s2] sm:$0x1]
  %v45 = vlaneseq
  %v46 = vshrl.u32 %v45, 7
  %v47 = vsub.s32 0, %v46
  %v48 = vrot.slane %v43, %v47
  %50 = vmatprep.subr.mxu0 0.0
  %51 = vmatpush1.msra.mxu0 %v42
  %52 = vmatprep.subr.mxu0 0.0
  %53 = vmatpush1.msra.mxu0 %v41
  %54 = vmatprep.subr.mxu0 0.0
  %55 = vmatpush1.msra.mxu0 %v40
  %56 = vmatprep.subr.mxu0 0.0
  %57 = vmatpush1.msra.mxu0 %v39
  %58 = vmatprep.subr.mxu0 0.0
  %59 = vmatpush1.msra.mxu0 %v38
  %60 = vmatprep.subr.mxu0 0.0
  %61 = vmatpush1.msra.mxu0 %v37
  %62 = vmatprep.subr.mxu0 0.0
  %63 = vmatpush1.msra.mxu0 %v36
  %64 = vmatprep.subr.mxu0 0.0
  %65 = vmatpush1.msra.mxu0 %v35
  %66 = vmatprep.subr.mxu0 0.0
  %67 = vmatpush1.msra.mxu0 %v34
  %68 = vmatprep.subr.mxu0 0.0
  %69 = vmatpush1.msra.mxu0 %v33
  %70 = vmatprep.subr.mxu0 0.0
  %71 = vmatpush1.msra.mxu0 %v32
  %72 = vmatprep.subr.mxu0 0.0
  %73 = vmatpush1.msra.mxu0 %v31
  %74 = vmatprep.subr.mxu0 0.0
  %75 = vmatpush1.msra.mxu0 %v30
  %76 = vmatprep.subr.mxu0 0.0
  %77 = vmatpush1.msra.mxu0 %v29
  %78 = vmatprep.subr.mxu0 0.0
  %79 = vmatpush1.msra.mxu0 %v28
  %80 = vmatprep.subr.mxu0 0.0
  %81 = vmatpush1.msra.mxu0 %v27
  %82 = vmatprep.subr.mxu0 0.0
  %83 = vmatpush2.msra.mxu0 0.0
  %84 = vmatprep.subr.mxu0 0.0
  %85 = vmatpush2.msra.mxu0 0.0
  %86 = vmatprep.subr.mxu0 0.0
  %87 = vmatpush2.msra.mxu0 0.0
  %88 = vmatprep.subr.mxu0 0.0
  %89 = vmatpush2.msra.mxu0 0.0
  %90 = vmatprep.subr.mxu0 0.0
  %91 = vmatpush2.msra.mxu0 0.0
  %92 = vmatprep.subr.mxu0 0.0
  %93 = vmatpush2.msra.mxu0 0.0
  %94 = vmatprep.subr.mxu0 0.0
  %95 = vmatpush2.msra.mxu0 0.0
  %96 = vmatprep.subr.mxu0 0.0
  %97 = vmatpush2.msra.mxu0 0.0
  %98 = vmatprep.subr.mxu0 0.0
  %99 = vmatpush2.msra.mxu0 0.0
  %100 = vmatprep.subr.mxu0 0.0
  %101 = vmatpush2.msra.mxu0 0.0
  %102 = vmatprep.subr.mxu0 0.0
  %103 = vmatpush2.msra.mxu0 0.0
  %104 = vmatprep.subr.mxu0 0.0
  %105 = vmatpush2.msra.mxu0 0.0
  %106 = vmatprep.subr.mxu0 0.0
  %107 = vmatpush2.msra.mxu0 0.0
  %108 = vmatprep.subr.mxu0 0.0
  %109 = vmatpush2.msra.mxu0 0.0
  %110 = vmatprep.subr.mxu0 0.0
  %111 = vmatpush2.msra.mxu0 0.0
  %112 = vmatprep.subr.mxu0 0.0
  %113 = vmatpush2.msra.mxu0 0.0
  %114 = vmatprep.mubr.f32.mxu0 0.0
  %115 = vmatmul.mubr.f32.gmra.mxu0 %v26
  %v116 = vpop.f32.mrf.mxu0
  %v117 = vadd.f32 %v48, %v116
  %v118 = vpop.f32.mrf.mxu0
  %119 = vdwg.mxu0
  %v120 = vmax.f32 %v117, 0.0
  %v121 = vld [vmem:[%s3] sm:$0xff]
  %v122 = vld [vmem:[%s3 + $0x8] sm:$0xff]
  %v123 = vld [vmem:[%s3 + $0x10] sm:$0xff]
  %v124 = vld [vmem:[%s3 + $0x18] sm:$0xff]
  %v125 = vld [vmem:[%s3 + $0x20] sm:$0xff]
  %v126 = vld [vmem:[%s3 + $0x28] sm:$0xff]
  %v127 = vld [vmem:[%s3 + $0x30] sm:$0xff]
  %v128 = vld [vmem:[%s3 + $0x38] sm:$0xff]
  %v129 = vld [vmem:[%s4] sm:$0x1]
  %v131 = vlaneseq
  %v132 = vshrl.u32 %v131, 7
  %v133 = vsub.s32 0, %v132
  %v134 = vrot.slane %v129, %v133
  %vm136 = vcmask 523264
  %v138 = vsel %vm136, %v120, 0
  %140 = vmatprep.subr.mxu0 0.0
  %141 = vmatpush1.msra.mxu0 0.0
  %142 = vmatprep.subr.mxu0 0.0
  %143 = vmatpush1.msra.mxu0 0.0
  %144 = vmatprep.subr.mxu0 0.0
  %145 = vmatpush1.msra.mxu0 0.0
  %146 = vmatprep.subr.mxu0 0.0
  %147 = vmatpush1.msra.mxu0 0.0
  %148 = vmatprep.subr.mxu0 0.0
  %149 = vmatpush1.msra.mxu0 0.0
  %150 = vmatprep.subr.mxu0 0.0
  %151 = vmatpush1.msra.mxu0 0.0
  %152 = vmatprep.subr.mxu0 0.0
  %153 = vmatpush1.msra.mxu0 0.0
  %154 = vmatprep.subr.mxu0 0.0
  %155 = vmatpush1.msra.mxu0 0.0
  %156 = vmatprep.subr.mxu0 0.0
  %157 = vmatpush1.msra.mxu0 %v128
  %158 = vmatprep.subr.mxu0 0.0
  %159 = vmatpush1.msra.mxu0 %v127
  %160 = vmatprep.subr.mxu0 0.0
  %161 = vmatpush1.msra.mxu0 %v126
  %162 = vmatprep.subr.mxu0 0.0
  %163 = vmatpush1.msra.mxu0 %v125
  %164 = vmatprep.subr.mxu0 0.0
  %165 = vmatpush1.msra.mxu0 %v124
  %166 = vmatprep.subr.mxu0 0.0
  %167 = vmatpush1.msra.mxu0 %v123
  %168 = vmatprep.subr.mxu0 0.0
  %169 = vmatpush1.msra.mxu0 %v122
  %170 = vmatprep.subr.mxu0 0.0
  %171 = vmatpush1.msra.mxu0 %v121
  %172 = vmatprep.subr.mxu0 0.0
  %173 = vmatpush2.msra.mxu0 0.0
  %174 = vmatprep.subr.mxu0 0.0
  %175 = vmatpush2.msra.mxu0 0.0
  %176 = vmatprep.subr.mxu0 0.0
  %177 = vmatpush2.msra.mxu0 0.0
  %178 = vmatprep.subr.mxu0 0.0
  %179 = vmatpush2.msra.mxu0 0.0
  %180 = vmatprep.subr.mxu0 0.0
  %181 = vmatpush2.msra.mxu0 0.0
  %182 = vmatprep.subr.mxu0 0.0
  %183 = vmatpush2.msra.mxu0 0.0
  %184 = vmatprep.subr.mxu0 0.0
  %185 = vmatpush2.msra.mxu0 0.0
  %186 = vmatprep.subr.mxu0 0.0
  %187 = vmatpush2.msra.mxu0 0.0
  %188 = vmatprep.subr.mxu0 0.0
  %189 = vmatpush2.msra.mxu0 0.0
  %190 = vmatprep.subr.mxu0 0.0
  %191 = vmatpush2.msra.mxu0 0.0
  %192 = vmatprep.subr.mxu0 0.0
  %193 = vmatpush2.msra.mxu0 0.0
  %194 = vmatprep.subr.mxu0 0.0
  %195 = vmatpush2.msra.mxu0 0.0
  %196 = vmatprep.subr.mxu0 0.0
  %197 = vmatpush2.msra.mxu0 0.0
  %198 = vmatprep.subr.mxu0 0.0
  %199 = vmatpush2.msra.mxu0 0.0
  %200 = vmatprep.subr.mxu0 0.0
  %201 = vmatpush2.msra.mxu0 0.0
  %202 = vmatprep.subr.mxu0 0.0
  %203 = vmatpush2.msra.mxu0 0.0
  %204 = vmatprep.mubr.f32.mxu0 0.0
  %205 = vmatmul.mubr.f32.gmra.mxu0 %v138
  %v206 = vpop.f32.mrf.mxu0
  %v207 = vadd.f32 %v134, %v206
  %v208 = vpop.f32.mrf.mxu0
  %209 = vdwg.mxu0
  %v210 = vmax.f32 %v207, 0.0
  %v211 = vld [vmem:[%s5] sm:$0xff]
  %v212 = vld [vmem:[%s5 + $0x8] sm:$0xff]
  %v213 = vld [vmem:[%s5 + $0x10] sm:$0xff]
  %v214 = vld [vmem:[%s5 + $0x18] sm:$0xff]
  %v215 = vld [vmem:[%s6] sm:$0x1]
  %v217 = vlaneseq
  %v218 = vshrl.u32 %v217, 7
  %v219 = vsub.s32 0, %v218
  %v220 = vrot.slane %v215, %v219
  %vm222 = vcmask 261120
  %v224 = vsel %vm222, %v210, 0
  %226 = vmatprep.subr.mxu0 0.0
  %227 = vmatpush1.msra.mxu0 0.0
  %228 = vmatprep.subr.mxu0 0.0
  %229 = vmatpush1.msra.mxu0 0.0
  %230 = vmatprep.subr.mxu0 0.0
  %231 = vmatpush1.msra.mxu0 0.0
  %232 = vmatprep.subr.mxu0 0.0
  %233 = vmatpush1.msra.mxu0 0.0
  %234 = vmatprep.subr.mxu0 0.0
  %235 = vmatpush1.msra.mxu0 0.0
  %236 = vmatprep.subr.mxu0 0.0
  %237 = vmatpush1.msra.mxu0 0.0
  %238 = vmatprep.subr.mxu0 0.0
  %239 = vmatpush1.msra.mxu0 0.0
  %240 = vmatprep.subr.mxu0 0.0
  %241 = vmatpush1.msra.mxu0 0.0
  %242 = vmatprep.subr.mxu0 0.0
  %243 = vmatpush1.msra.mxu0 0.0
  %244 = vmatprep.subr.mxu0 0.0
  %245 = vmatpush1.msra.mxu0 0.0
  %246 = vmatprep.subr.mxu0 0.0
  %247 = vmatpush1.msra.mxu0 0.0
  %248 = vmatprep.subr.mxu0 0.0
  %249 = vmatpush1.msra.mxu0 0.0
  %250 = vmatprep.subr.mxu0 0.0
  %251 = vmatpush1.msra.mxu0 %v214
  %252 = vmatprep.subr.mxu0 0.0
  %253 = vmatpush1.msra.mxu0 %v213
  %254 = vmatprep.subr.mxu0 0.0
  %255 = vmatpush1.msra.mxu0 %v212
  %256 = vmatprep.subr.mxu0 0.0
  %257 = vmatpush1.msra.mxu0 %v211
  %258 = vmatprep.subr.mxu0 0.0
  %259 = vmatpush2.msra.mxu0 0.0
  %260 = vmatprep.subr.mxu0 0.0
  %261 = vmatpush2.msra.mxu0 0.0
  %262 = vmatprep.subr.mxu0 0.0
  %263 = vmatpush2.msra.mxu0 0.0
  %264 = vmatprep.subr.mxu0 0.0
  %265 = vmatpush2.msra.mxu0 0.0
  %266 = vmatprep.subr.mxu0 0.0
  %267 = vmatpush2.msra.mxu0 0.0
  %268 = vmatprep.subr.mxu0 0.0
  %269 = vmatpush2.msra.mxu0 0.0
  %270 = vmatprep.subr.mxu0 0.0
  %271 = vmatpush2.msra.mxu0 0.0
  %272 = vmatprep.subr.mxu0 0.0
  %273 = vmatpush2.msra.mxu0 0.0
  %274 = vmatprep.subr.mxu0 0.0
  %275 = vmatpush2.msra.mxu0 0.0
  %276 = vmatprep.subr.mxu0 0.0
  %277 = vmatpush2.msra.mxu0 0.0
  %278 = vmatprep.subr.mxu0 0.0
  %279 = vmatpush2.msra.mxu0 0.0
  %280 = vmatprep.subr.mxu0 0.0
  %281 = vmatpush2.msra.mxu0 0.0
  %282 = vmatprep.subr.mxu0 0.0
  %283 = vmatpush2.msra.mxu0 0.0
  %284 = vmatprep.subr.mxu0 0.0
  %285 = vmatpush2.msra.mxu0 0.0
  %286 = vmatprep.subr.mxu0 0.0
  %287 = vmatpush2.msra.mxu0 0.0
  %288 = vmatprep.subr.mxu0 0.0
  %289 = vmatpush2.msra.mxu0 0.0
  %290 = vmatprep.mubr.f32.mxu0 0.0
  %291 = vmatmul.mubr.f32.gmra.mxu0 %v224
  %v292 = vpop.f32.mrf.mxu0
  %v293 = vadd.f32 %v220, %v292
  %v294 = vpop.f32.mrf.mxu0
  %295 = vdwg.mxu0
  %v296 = vmul.f32 %v293, 0.5
  %v297 = vtanh.pop %v296
  %v298 = vadd.f32 %v297, 1.0
  %v299 = vmul.f32 %v298, 0.5
  %vm300 = vcmask 25600
  %301 = vst.msk [vmem:[%s7] sm:$0x3] %vm300, %v299
  // Predicated region
  $region30: #{_fraud_forward_impl.1} parent=0 // pred_check
    _
  $region31: #{_fraud_forward_impl.1} parent=0 // pred_check_branch
    %303 = sbr.rel (0) target = $region33
  $region32: #{_fraud_forward_impl.1} parent=0 // pred_region
    _
  $region33: #{_fraud_forward_impl.1} parent=0 // pred_fallthru
    _
  // Predicated region
  $region34: #{_fraud_forward_impl.1} parent=0 // pred_check
    _
  $region35: #{_fraud_forward_impl.1} parent=0 // pred_check_branch
    %305 = sbr.rel (0) target = $region37
  $region36: #{_fraud_forward_impl.1} parent=0 // pred_region
    _
  $region37: #{_fraud_forward_impl.1} parent=0 // pred_fallthru
    _

</llo_original>
